<compile_context>
chip_gen: v7x
topology: tpu7x:2x2x1
jax: 0.10.0
libtpu: 0.0.40
codegen_flags: <defaults>
</compile_context>

<pallas_src>
import functools

import jax
import jax.numpy as jnp
from jax.experimental import pallas as pl
from jax.experimental.pallas import tpu as pltpu

LANE = 128
SUBLANE = 8
NUM_HIDDEN = 6
BN_EPS = 1e-5


def _round_up(x: int, m: int) -> int:
    return ((x + m - 1) // m) * m


# ---------------------------------------------------------------------------
# Kernel: the full 7-layer MLP for one batch tile.
#   refs = (x_ref, w0, b0, w1, b1, ..., w6, b6, o_ref)
# ---------------------------------------------------------------------------
def _fused_mlp_kernel(x_ref, *refs):
    o_ref = refs[-1]
    wb_refs = refs[:-1]
    num_layers = len(wb_refs) // 2

    h = x_ref[...]                                    # (TM, F_in_p) f32
    for li in range(num_layers):                      # unrolled: 7 fixed layers
        w = wb_refs[2 * li][...]                      # (K_p, M_p)  f32 or bf16
        b = wb_refs[2 * li + 1][...]                  # (1,  M_p)   f32
        y = jnp.dot(h.astype(w.dtype), w,             # MXU matmul, f32 accumulation
                    preferred_element_type=jnp.float32)
        y = y + b                                     # f32 epilogue
        if li < num_layers - 1:
            y = jnp.maximum(y, 0.0)                   # ReLU on hidden layers only
        h = y
    o_ref[...] = h.astype(o_ref.dtype)


# ---------------------------------------------------------------------------
# Wrapper: batch tiling, zero-padding, single fused pallas_call.
# ---------------------------------------------------------------------------
@functools.partial(jax.jit, static_argnames=("output_features", "tm_max"))
def fc_base_forward(x, layers, *, output_features, tm_max=256):
    """layers = list of 7 (W_padded (in_p,out_p), b_padded (1,out_p)) tuples."""
    n, f_in = x.shape
    f_in_p = layers[0][0].shape[0]
    f_out_p = layers[-1][0].shape[1]
    assert f_in <= f_in_p

    # Batch tile: multiple of 8 sublanes; pad batch to a whole number of tiles so
    # no partial blocks are ever read or stored.
    n8 = _round_up(n, SUBLANE)
    tm = min(_round_up(max(tm_max, SUBLANE), SUBLANE), n8)
    n_pad = _round_up(n, tm)
    grid = (n_pad // tm,)

    x_p = jnp.zeros((n_pad, f_in_p), jnp.float32).at[:n, :f_in].set(x)

    in_specs = [pl.BlockSpec((tm, f_in_p), lambda i: (i, 0))]
    operands = [x_p]
    for w, b in layers:
        in_specs.append(pl.BlockSpec(w.shape, lambda i: (0, 0)))  # resident weights
        in_specs.append(pl.BlockSpec(b.shape, lambda i: (0, 0)))
        operands.append(w)
        operands.append(b)

    flops = 2 * n_pad * sum(int(w.shape[0]) * int(w.shape[1]) for w, _ in layers)
    bytes_accessed = (
        x_p.size * x_p.dtype.itemsize
        + sum(w.size * w.dtype.itemsize + b.size * b.dtype.itemsize for w, b in layers)
        + n_pad * f_out_p * 4
    )
    cost = pl.CostEstimate(flops=flops, transcendentals=0,
                           bytes_accessed=bytes_accessed)

    out_p = pl.pallas_call(
        _fused_mlp_kernel,
        out_shape=jax.ShapeDtypeStruct((n_pad, f_out_p), jnp.float32),
        grid=grid,
        in_specs=in_specs,
        out_specs=pl.BlockSpec((tm, f_out_p), lambda i: (i, 0)),
        compiler_params=pltpu.CompilerParams(dimension_semantics=("parallel",)),
        cost_estimate=cost,
    )(*operands)

    return out_p[:n, :output_features]


# ---------------------------------------------------------------------------
# Parameters: raw (PyTorch-shaped) params + fold/pad/cast preparation.
# ---------------------------------------------------------------------------
def init_fc_base_raw_params(key, input_features, base_features, output_features):
    """Deterministic synthetic params mirroring the PyTorch module (W stored (in,out))."""
    dims = [input_features] + [base_features] * NUM_HIDDEN
    hidden = []
    for li in range(NUM_HIDDEN):
        key, kw, kb, kg, kbt, km, kv = jax.random.split(key, 7)
        fan_in = dims[li]
        bound = 1.0 / float(fan_in) ** 0.5
        w = jax.random.uniform(kw, (fan_in, base_features), jnp.float32, -bound, bound)
        b = jax.random.uniform(kb, (base_features,), jnp.float32, -bound, bound)
        gamma = 1.0 + 0.1 * jax.random.normal(kg, (base_features,), jnp.float32)
        beta = 0.1 * jax.random.normal(kbt, (base_features,), jnp.float32)
        mean = 0.1 * jax.random.normal(km, (base_features,), jnp.float32)
        var = jnp.abs(1.0 + 0.1 * jax.random.normal(kv, (base_features,), jnp.float32))
        hidden.append(dict(w=w, b=b, gamma=gamma, beta=beta, mean=mean, var=var))
    key, kw, kb = jax.random.split(key, 3)
    bound = 1.0 / float(base_features) ** 0.5
    wf = jax.random.uniform(kw, (base_features, output_features), jnp.float32, -bound, bound)
    bf = jax.random.uniform(kb, (output_features,), jnp.float32, -bound, bound)
    return hidden, (wf, bf)


def prepare_fused_params(hidden, final, *, weight_dtype=jnp.float32, eps=BN_EPS):
    """Fold eval-mode BN into each Linear; zero-pad all dims to multiples of 128."""
    def pad_wb(w, b):
        in_p = _round_up(w.shape[0], LANE)
        out_p = _round_up(w.shape[1], LANE)
        w_p = jnp.zeros((in_p, out_p), jnp.float32).at[:w.shape[0], :w.shape[1]].set(w)
        b_p = jnp.zeros((1, out_p), jnp.float32).at[0, :b.shape[0]].set(b)
        return w_p.astype(weight_dtype), b_p           # bias stays f32

    layers = []
    for p in hidden:
        scale = p["gamma"] / jnp.sqrt(p["var"] + eps)
        w_fold = p["w"] * scale[None, :]
        b_fold = (p["b"] - p["mean"]) * scale + p["beta"]
        layers.append(pad_wb(w_fold, b_fold))
    wf, bf = final
    layers.append(pad_wb(wf, bf))
    return layers


# ---------------------------------------------------------------------------
# Pure-JAX references.
# ---------------------------------------------------------------------------
def reference_forward(x, hidden, final, eps=BN_EPS):
    """PyTorch eval-mode semantics (un-folded, un-padded, f32)."""
    h = x
    for p in hidden:
        y = jnp.dot(h, p["w"], precision=jax.lax.Precision.HIGHEST) + p["b"]
        y = (y - p["mean"]) / jnp.sqrt(p["var"] + eps) * p["gamma"] + p["beta"]
        h = jnp.maximum(y, 0.0)
    wf, bf = final
    return jnp.dot(h, wf, precision=jax.lax.Precision.HIGHEST) + bf


def padded_reference(x, layers, output_features):
    """Matches the fused kernel numerics (including any bf16 weight/activation casts)."""
    n, f_in = x.shape
    f_in_p = layers[0][0].shape[0]
    h = jnp.zeros((n, f_in_p), jnp.float32).at[:, :f_in].set(x)
    for li, (w, b) in enumerate(layers):
        y = jnp.dot(h.astype(w.dtype).astype(jnp.float32), w.astype(jnp.float32),
                    precision=jax.lax.Precision.HIGHEST) + b
        h = jnp.maximum(y, 0.0) if li < len(layers) - 1 else y
    return h[:, :output_features]


if __name__ == "__main__":
    key = jax.random.PRNGKey(0)
    k_param, k_x1, k_x2 = jax.random.split(key, 3)

    input_features = 16
    base_features = 32
    output_features = 4

    hidden, final = init_fc_base_raw_params(
        k_param, input_features, base_features, output_features)

    # ---- test 1: f32 weights, tiny batch (single tile) --------------------
    x1 = jax.random.normal(k_x1, (8, input_features), jnp.float32)
    layers_f32 = prepare_fused_params(hidden, final, weight_dtype=jnp.float32)
    out1 = fc_base_forward(x1, layers_f32, output_features=output_features, tm_max=256)
    jax.block_until_ready(out1)
    assert out1.shape == (8, output_features), out1.shape
    assert out1.dtype == jnp.float32
    ref1 = reference_forward(x1, hidden, final)
    assert jnp.allclose(out1, ref1, atol=1e-4, rtol=1e-4), \
        float(jnp.max(jnp.abs(out1 - ref1)))

    # ---- test 2: bf16 weights, batch padded and tiled over the grid -------
    x2 = jax.random.normal(k_x2, (200, input_features), jnp.float32)
    layers_bf16 = prepare_fused_params(hidden, final, weight_dtype=jnp.bfloat16)
    out2 = fc_base_forward(x2, layers_bf16, output_features=output_features, tm_max=64)
    jax.block_until_ready(out2)
    assert out2.shape == (200, output_features), out2.shape
    assert out2.dtype == jnp.float32
    ref2 = padded_reference(x2, layers_bf16, output_features)
    assert jnp.allclose(out2, ref2, atol=1e-3, rtol=1e-3), \
        float(jnp.max(jnp.abs(out2 - ref2)))

    print("KERNEL_OK")
</pallas_src>

<mosaic_0001>
module attributes {stable_mosaic.version = 11 : i64} {
  func.func @_fused_mlp_kernel(%arg0: i32, %arg1: memref<8x128xf32, #tpu.memory_space<vmem>>, %arg2: memref<128x128xf32, #tpu.memory_space<vmem>>, %arg3: memref<1x128xf32, #tpu.memory_space<vmem>>, %arg4: memref<128x128xf32, #tpu.memory_space<vmem>>, %arg5: memref<1x128xf32, #tpu.memory_space<vmem>>, %arg6: memref<128x128xf32, #tpu.memory_space<vmem>>, %arg7: memref<1x128xf32, #tpu.memory_space<vmem>>, %arg8: memref<128x128xf32, #tpu.memory_space<vmem>>, %arg9: memref<1x128xf32, #tpu.memory_space<vmem>>, %arg10: memref<128x128xf32, #tpu.memory_space<vmem>>, %arg11: memref<1x128xf32, #tpu.memory_space<vmem>>, %arg12: memref<128x128xf32, #tpu.memory_space<vmem>>, %arg13: memref<1x128xf32, #tpu.memory_space<vmem>>, %arg14: memref<128x128xf32, #tpu.memory_space<vmem>>, %arg15: memref<1x128xf32, #tpu.memory_space<vmem>>, %arg16: memref<8x128xf32, #tpu.memory_space<vmem>>) attributes {dimension_semantics = [#tpu.dimension_semantics<parallel>], iteration_bounds = array<i64: 1>, scalar_prefetch = 0 : i64, scratch_operands = 0 : i64, tpu.core_type = #tpu.core_type<tc>, window_params = [{transform_indices = @transform_0, window_bounds = array<i64: 8, 128>}, {pipeline_mode = #tpu.pipeline_mode<synchronous>, transform_indices = @transform_1, window_bounds = array<i64: 128, 128>}, {pipeline_mode = #tpu.pipeline_mode<synchronous>, transform_indices = @transform_2, window_bounds = array<i64: 1, 128>}, {pipeline_mode = #tpu.pipeline_mode<synchronous>, transform_indices = @transform_3, window_bounds = array<i64: 128, 128>}, {pipeline_mode = #tpu.pipeline_mode<synchronous>, transform_indices = @transform_4, window_bounds = array<i64: 1, 128>}, {pipeline_mode = #tpu.pipeline_mode<synchronous>, transform_indices = @transform_5, window_bounds = array<i64: 128, 128>}, {pipeline_mode = #tpu.pipeline_mode<synchronous>, transform_indices = @transform_6, window_bounds = array<i64: 1, 128>}, {pipeline_mode = #tpu.pipeline_mode<synchronous>, transform_indices = @transform_7, window_bounds = array<i64: 128, 128>}, {pipeline_mode = #tpu.pipeline_mode<synchronous>, transform_indices = @transform_8, window_bounds = array<i64: 1, 128>}, {pipeline_mode = #tpu.pipeline_mode<synchronous>, transform_indices = @transform_9, window_bounds = array<i64: 128, 128>}, {pipeline_mode = #tpu.pipeline_mode<synchronous>, transform_indices = @transform_10, window_bounds = array<i64: 1, 128>}, {pipeline_mode = #tpu.pipeline_mode<synchronous>, transform_indices = @transform_11, window_bounds = array<i64: 128, 128>}, {pipeline_mode = #tpu.pipeline_mode<synchronous>, transform_indices = @transform_12, window_bounds = array<i64: 1, 128>}, {pipeline_mode = #tpu.pipeline_mode<synchronous>, transform_indices = @transform_13, window_bounds = array<i64: 128, 128>}, {pipeline_mode = #tpu.pipeline_mode<synchronous>, transform_indices = @transform_14, window_bounds = array<i64: 1, 128>}, {transform_indices = @transform_15, window_bounds = array<i64: 8, 128>}]} {
    %c0 = arith.constant 0 : index
    %c0_0 = arith.constant 0 : index
    %0 = vector.load %arg1[%c0, %c0_0] : memref<8x128xf32, #tpu.memory_space<vmem>>, vector<8x128xf32>
    %c0_1 = arith.constant 0 : index
    %c0_2 = arith.constant 0 : index
    %1 = vector.load %arg2[%c0_1, %c0_2] : memref<128x128xf32, #tpu.memory_space<vmem>>, vector<128x128xf32>
    %c0_3 = arith.constant 0 : index
    %c0_4 = arith.constant 0 : index
    %2 = vector.load %arg3[%c0_3, %c0_4] : memref<1x128xf32, #tpu.memory_space<vmem>>, vector<1x128xf32>
    %cst = arith.constant dense<0.000000e+00> : vector<8x128xf32>
    %3 = tpu.matmul %0, %1, %cst {dimension_numbers = #tpu.dot_dimension_numbers<[1], [0], [0], [1], [0, 0, 1, 1], [], []>} : vector<8x128xf32>, vector<128x128xf32>, vector<8x128xf32> -> vector<8x128xf32>
    %4 = vector.broadcast %2 : vector<1x128xf32> to vector<8x128xf32>
    %5 = arith.addf %3, %4 : vector<8x128xf32>
    %cst_5 = arith.constant 0.000000e+00 : f32
    %6 = vector.broadcast %cst_5 : f32 to vector<8x128xf32>
    %7 = arith.maximumf %5, %6 : vector<8x128xf32>
    %c0_6 = arith.constant 0 : index
    %c0_7 = arith.constant 0 : index
    %8 = vector.load %arg4[%c0_6, %c0_7] : memref<128x128xf32, #tpu.memory_space<vmem>>, vector<128x128xf32>
    %c0_8 = arith.constant 0 : index
    %c0_9 = arith.constant 0 : index
    %9 = vector.load %arg5[%c0_8, %c0_9] : memref<1x128xf32, #tpu.memory_space<vmem>>, vector<1x128xf32>
    %cst_10 = arith.constant dense<0.000000e+00> : vector<8x128xf32>
    %10 = tpu.matmul %7, %8, %cst_10 {dimension_numbers = #tpu.dot_dimension_numbers<[1], [0], [0], [1], [0, 0, 1, 1], [], []>} : vector<8x128xf32>, vector<128x128xf32>, vector<8x128xf32> -> vector<8x128xf32>
    %11 = vector.broadcast %9 : vector<1x128xf32> to vector<8x128xf32>
    %12 = arith.addf %10, %11 : vector<8x128xf32>
    %cst_11 = arith.constant 0.000000e+00 : f32
    %13 = vector.broadcast %cst_11 : f32 to vector<8x128xf32>
    %14 = arith.maximumf %12, %13 : vector<8x128xf32>
    %c0_12 = arith.constant 0 : index
    %c0_13 = arith.constant 0 : index
    %15 = vector.load %arg6[%c0_12, %c0_13] : memref<128x128xf32, #tpu.memory_space<vmem>>, vector<128x128xf32>
    %c0_14 = arith.constant 0 : index
    %c0_15 = arith.constant 0 : index
    %16 = vector.load %arg7[%c0_14, %c0_15] : memref<1x128xf32, #tpu.memory_space<vmem>>, vector<1x128xf32>
    %cst_16 = arith.constant dense<0.000000e+00> : vector<8x128xf32>
    %17 = tpu.matmul %14, %15, %cst_16 {dimension_numbers = #tpu.dot_dimension_numbers<[1], [0], [0], [1], [0, 0, 1, 1], [], []>} : vector<8x128xf32>, vector<128x128xf32>, vector<8x128xf32> -> vector<8x128xf32>
    %18 = vector.broadcast %16 : vector<1x128xf32> to vector<8x128xf32>
    %19 = arith.addf %17, %18 : vector<8x128xf32>
    %cst_17 = arith.constant 0.000000e+00 : f32
    %20 = vector.broadcast %cst_17 : f32 to vector<8x128xf32>
    %21 = arith.maximumf %19, %20 : vector<8x128xf32>
    %c0_18 = arith.constant 0 : index
    %c0_19 = arith.constant 0 : index
    %22 = vector.load %arg8[%c0_18, %c0_19] : memref<128x128xf32, #tpu.memory_space<vmem>>, vector<128x128xf32>
    %c0_20 = arith.constant 0 : index
    %c0_21 = arith.constant 0 : index
    %23 = vector.load %arg9[%c0_20, %c0_21] : memref<1x128xf32, #tpu.memory_space<vmem>>, vector<1x128xf32>
    %cst_22 = arith.constant dense<0.000000e+00> : vector<8x128xf32>
    %24 = tpu.matmul %21, %22, %cst_22 {dimension_numbers = #tpu.dot_dimension_numbers<[1], [0], [0], [1], [0, 0, 1, 1], [], []>} : vector<8x128xf32>, vector<128x128xf32>, vector<8x128xf32> -> vector<8x128xf32>
    %25 = vector.broadcast %23 : vector<1x128xf32> to vector<8x128xf32>
    %26 = arith.addf %24, %25 : vector<8x128xf32>
    %cst_23 = arith.constant 0.000000e+00 : f32
    %27 = vector.broadcast %cst_23 : f32 to vector<8x128xf32>
    %28 = arith.maximumf %26, %27 : vector<8x128xf32>
    %c0_24 = arith.constant 0 : index
    %c0_25 = arith.constant 0 : index
    %29 = vector.load %arg10[%c0_24, %c0_25] : memref<128x128xf32, #tpu.memory_space<vmem>>, vector<128x128xf32>
    %c0_26 = arith.constant 0 : index
    %c0_27 = arith.constant 0 : index
    %30 = vector.load %arg11[%c0_26, %c0_27] : memref<1x128xf32, #tpu.memory_space<vmem>>, vector<1x128xf32>
    %cst_28 = arith.constant dense<0.000000e+00> : vector<8x128xf32>
    %31 = tpu.matmul %28, %29, %cst_28 {dimension_numbers = #tpu.dot_dimension_numbers<[1], [0], [0], [1], [0, 0, 1, 1], [], []>} : vector<8x128xf32>, vector<128x128xf32>, vector<8x128xf32> -> vector<8x128xf32>
    %32 = vector.broadcast %30 : vector<1x128xf32> to vector<8x128xf32>
    %33 = arith.addf %31, %32 : vector<8x128xf32>
    %cst_29 = arith.constant 0.000000e+00 : f32
    %34 = vector.broadcast %cst_29 : f32 to vector<8x128xf32>
    %35 = arith.maximumf %33, %34 : vector<8x128xf32>
    %c0_30 = arith.constant 0 : index
    %c0_31 = arith.constant 0 : index
    %36 = vector.load %arg12[%c0_30, %c0_31] : memref<128x128xf32, #tpu.memory_space<vmem>>, vector<128x128xf32>
    %c0_32 = arith.constant 0 : index
    %c0_33 = arith.constant 0 : index
    %37 = vector.load %arg13[%c0_32, %c0_33] : memref<1x128xf32, #tpu.memory_space<vmem>>, vector<1x128xf32>
    %cst_34 = arith.constant dense<0.000000e+00> : vector<8x128xf32>
    %38 = tpu.matmul %35, %36, %cst_34 {dimension_numbers = #tpu.dot_dimension_numbers<[1], [0], [0], [1], [0, 0, 1, 1], [], []>} : vector<8x128xf32>, vector<128x128xf32>, vector<8x128xf32> -> vector<8x128xf32>
    %39 = vector.broadcast %37 : vector<1x128xf32> to vector<8x128xf32>
    %40 = arith.addf %38, %39 : vector<8x128xf32>
    %cst_35 = arith.constant 0.000000e+00 : f32
    %41 = vector.broadcast %cst_35 : f32 to vector<8x128xf32>
    %42 = arith.maximumf %40, %41 : vector<8x128xf32>
    %c0_36 = arith.constant 0 : index
    %c0_37 = arith.constant 0 : index
    %43 = vector.load %arg14[%c0_36, %c0_37] : memref<128x128xf32, #tpu.memory_space<vmem>>, vector<128x128xf32>
    %c0_38 = arith.constant 0 : index
    %c0_39 = arith.constant 0 : index
    %44 = vector.load %arg15[%c0_38, %c0_39] : memref<1x128xf32, #tpu.memory_space<vmem>>, vector<1x128xf32>
    %cst_40 = arith.constant dense<0.000000e+00> : vector<8x128xf32>
    %45 = tpu.matmul %42, %43, %cst_40 {dimension_numbers = #tpu.dot_dimension_numbers<[1], [0], [0], [1], [0, 0, 1, 1], [], []>} : vector<8x128xf32>, vector<128x128xf32>, vector<8x128xf32> -> vector<8x128xf32>
    %46 = vector.broadcast %44 : vector<1x128xf32> to vector<8x128xf32>
    %47 = arith.addf %45, %46 : vector<8x128xf32>
    %c0_41 = arith.constant 0 : index
    %c0_42 = arith.constant 0 : index
    %48 = vector.load %arg16[%c0_41, %c0_42] : memref<8x128xf32, #tpu.memory_space<vmem>>, vector<8x128xf32>
    tpu.vector_store %arg16[%c0_41, %c0_42], %47 {strides = array<i32>} : memref<8x128xf32, #tpu.memory_space<vmem>>, vector<8x128xf32>,
    return
  }
  func.func @transform_0(%arg0: i32) -> (i32, i32) {
    %c0_i32 = arith.constant 0 : i32
    %c0_i32_0 = arith.constant 0 : i32
    return %arg0, %c0_i32 : i32, i32
  }
  func.func @transform_1(%arg0: i32) -> (i32, i32) {
    %c0_i32 = arith.constant 0 : i32
    %c0_i32_0 = arith.constant 0 : i32
    %c0_i32_1 = arith.constant 0 : i32
    return %c0_i32, %c0_i32_0 : i32, i32
  }
  func.func @transform_2(%arg0: i32) -> (i32, i32) {
    %c0_i32 = arith.constant 0 : i32
    %c0_i32_0 = arith.constant 0 : i32
    %c0_i32_1 = arith.constant 0 : i32
    return %c0_i32, %c0_i32_0 : i32, i32
  }
  func.func @transform_3(%arg0: i32) -> (i32, i32) {
    %c0_i32 = arith.constant 0 : i32
    %c0_i32_0 = arith.constant 0 : i32
    %c0_i32_1 = arith.constant 0 : i32
    return %c0_i32, %c0_i32_0 : i32, i32
  }
  func.func @transform_4(%arg0: i32) -> (i32, i32) {
    %c0_i32 = arith.constant 0 : i32
    %c0_i32_0 = arith.constant 0 : i32
    %c0_i32_1 = arith.constant 0 : i32
    return %c0_i32, %c0_i32_0 : i32, i32
  }
  func.func @transform_5(%arg0: i32) -> (i32, i32) {
    %c0_i32 = arith.constant 0 : i32
    %c0_i32_0 = arith.constant 0 : i32
    %c0_i32_1 = arith.constant 0 : i32
    return %c0_i32, %c0_i32_0 : i32, i32
  }
  func.func @transform_6(%arg0: i32) -> (i32, i32) {
    %c0_i32 = arith.constant 0 : i32
    %c0_i32_0 = arith.constant 0 : i32
    %c0_i32_1 = arith.constant 0 : i32
    return %c0_i32, %c0_i32_0 : i32, i32
  }
  func.func @transform_7(%arg0: i32) -> (i32, i32) {
    %c0_i32 = arith.constant 0 : i32
    %c0_i32_0 = arith.constant 0 : i32
    %c0_i32_1 = arith.constant 0 : i32
    return %c0_i32, %c0_i32_0 : i32, i32
  }
  func.func @transform_8(%arg0: i32) -> (i32, i32) {
    %c0_i32 = arith.constant 0 : i32
    %c0_i32_0 = arith.constant 0 : i32
    %c0_i32_1 = arith.constant 0 : i32
    return %c0_i32, %c0_i32_0 : i32, i32
  }
  func.func @transform_9(%arg0: i32) -> (i32, i32) {
    %c0_i32 = arith.constant 0 : i32
    %c0_i32_0 = arith.constant 0 : i32
    %c0_i32_1 = arith.constant 0 : i32
    return %c0_i32, %c0_i32_0 : i32, i32
  }
  func.func @transform_10(%arg0: i32) -> (i32, i32) {
    %c0_i32 = arith.constant 0 : i32
    %c0_i32_0 = arith.constant 0 : i32
    %c0_i32_1 = arith.constant 0 : i32
    return %c0_i32, %c0_i32_0 : i32, i32
  }
  func.func @transform_11(%arg0: i32) -> (i32, i32) {
    %c0_i32 = arith.constant 0 : i32
    %c0_i32_0 = arith.constant 0 : i32
    %c0_i32_1 = arith.constant 0 : i32
    return %c0_i32, %c0_i32_0 : i32, i32
  }
  func.func @transform_12(%arg0: i32) -> (i32, i32) {
    %c0_i32 = arith.constant 0 : i32
    %c0_i32_0 = arith.constant 0 : i32
    %c0_i32_1 = arith.constant 0 : i32
    return %c0_i32, %c0_i32_0 : i32, i32
  }
  func.func @transform_13(%arg0: i32) -> (i32, i32) {
    %c0_i32 = arith.constant 0 : i32
    %c0_i32_0 = arith.constant 0 : i32
    %c0_i32_1 = arith.constant 0 : i32
    return %c0_i32, %c0_i32_0 : i32, i32
  }
  func.func @transform_14(%arg0: i32) -> (i32, i32) {
    %c0_i32 = arith.constant 0 : i32
    %c0_i32_0 = arith.constant 0 : i32
    %c0_i32_1 = arith.constant 0 : i32
    return %c0_i32, %c0_i32_0 : i32, i32
  }
  func.func @transform_15(%arg0: i32) -> (i32, i32) {
    %c0_i32 = arith.constant 0 : i32
    %c0_i32_0 = arith.constant 0 : i32
    return %arg0, %c0_i32 : i32, i32
  }
}

</mosaic_0001>

<llo_original>
// kernel: fc_base_forward.1
$region0: #{fc_base_forward.1}
  #allocation0 [shape = 'u32[]', space=smem, size = 0x4, offset = 0x4, fixed_abs, tag = 'smem constant byte address 0x4 - core index']
  #allocation1 [shape = 'u32[144,128]{1,0:T(1,128)}', space=vmem, size = 0x12000, scoped, tag = 'internal scratch']
  %s0 = inlined_call_operand.vmem [shape: f32[8,128], index: 0, kind: input, shape index: {}]
  %s1 = inlined_call_operand.hbm [shape: f32[128,128], index: 1, kind: input, shape index: {}]
  %s2 = inlined_call_operand.vmem [shape: f32[1,128], index: 2, kind: input, shape index: {}]
  %s3 = inlined_call_operand.hbm [shape: f32[128,128], index: 3, kind: input, shape index: {}]
  %s4 = inlined_call_operand.vmem [shape: f32[1,128], index: 4, kind: input, shape index: {}]
  %s5 = inlined_call_operand.hbm [shape: f32[128,128], index: 5, kind: input, shape index: {}]
  %s6 = inlined_call_operand.vmem [shape: f32[1,128], index: 6, kind: input, shape index: {}]
  %s7 = inlined_call_operand.hbm [shape: f32[128,128], index: 7, kind: input, shape index: {}]
  %s8 = inlined_call_operand.vmem [shape: f32[1,128], index: 8, kind: input, shape index: {}]
  %s9 = inlined_call_operand.hbm [shape: f32[128,128], index: 9, kind: input, shape index: {}]
  %s10 = inlined_call_operand.vmem [shape: f32[1,128], index: 10, kind: input, shape index: {}]
  %s11 = inlined_call_operand.hbm [shape: f32[128,128], index: 11, kind: input, shape index: {}]
  %s12 = inlined_call_operand.vmem [shape: f32[1,128], index: 12, kind: input, shape index: {}]
  %s13 = inlined_call_operand.hbm [shape: f32[128,128], index: 13, kind: input, shape index: {}]
  %s14 = inlined_call_operand.vmem [shape: f32[1,128], index: 14, kind: input, shape index: {}]
  %s15 = inlined_call_operand.vmem [shape: f32[8,128], index: 15, kind: output, shape index: {}]
  %s16 = sld [smem:[#allocation0]]
  $region98: #{fc_base_forward.1} parent=0
    _
  %s18 = ssub.s32 1, %s16
  %s19 = scalar_select 0, %s18, %s16
  $region1: #{fc_base_forward.1} parent=0
    #allocation2 [shape = 'u8[65536]{0}', space=vmem, size = 0x10000, scoped, tag = 'input window, operand 1, single buffered']
    #allocation3 [shape = 's32[1]{0}', space=sflag, size = 0x4, scoped, tag = 'scoped memory for fc_base_forward.1']
    #allocation4 [shape = 'u8[65536]{0}', space=vmem, size = 0x10000, scoped, tag = 'input window, operand 3, single buffered']
    #allocation5 [shape = 's32[1]{0}', space=sflag, size = 0x4, scoped, tag = 'scoped memory for fc_base_forward.1']
    #allocation6 [shape = 'u8[65536]{0}', space=vmem, size = 0x10000, scoped, tag = 'input window, operand 5, single buffered']
    #allocation7 [shape = 'u8[65536]{0}', space=vmem, size = 0x10000, scoped, tag = 'input window, operand 7, single buffered']
    #allocation8 [shape = 's32[1]{0}', space=sflag, size = 0x4, scoped, tag = 'scoped memory for fc_base_forward.1']
    #allocation9 [shape = 'u8[65536]{0}', space=vmem, size = 0x10000, scoped, tag = 'input window, operand 9, single buffered']
    #allocation10 [shape = 'u8[65536]{0}', space=vmem, size = 0x10000, scoped, tag = 'input window, operand 11, single buffered']
    #allocation11 [shape = 's32[1]{0}', space=sflag, size = 0x4, scoped, tag = 'scoped memory for fc_base_forward.1']
    #allocation12 [shape = 'u8[65536]{0}', space=vmem, size = 0x10000, scoped, tag = 'input window, operand 13, single buffered']
    %20 = vsyncpa [#allocation3], 0
    %21 = vsyncpa [#allocation5], 0
    %22 = vsyncpa [#allocation8], 0
    %23 = vsyncpa [#allocation11], 0
    // Predicated region
    $region2: #{fc_base_forward.1} parent=1 // pred_check
      _
    $region3: #{fc_base_forward.1} parent=1 // pred_check_branch
      %25 = sbr.rel (0) target = $region5
    $region4: #{fc_base_forward.1} parent=1 // pred_region
      _
    $region5: #{fc_base_forward.1} parent=1 // pred_fallthru
      _
    // Predicated region
    $region6: #{fc_base_forward.1} parent=1 // pred_check
      _
    $region7: #{fc_base_forward.1} parent=1 // pred_check_branch
      %27 = sbr.rel (0) target = $region9
    $region8: #{fc_base_forward.1} parent=1 // pred_region
      %s29 = ssub.s32 2048, 2048
      %30 = vsyncadd [#allocation3], %s29
      %s31 = sshll.u32 [#allocation2], 4
      %s32 = int_to_ptr.vmem [resolvable:$true] %s31
      %37 = dma.hbm_to_vmem [thread:$0]  %s1, 2048, %s32, [#allocation3], 128, 128, 8
    $region9: #{fc_base_forward.1} parent=1 // pred_fallthru
      _
    // Predicated region
    $region10: #{fc_base_forward.1} parent=1 // pred_check
      _
    $region11: #{fc_base_forward.1} parent=1 // pred_check_branch
      %39 = sbr.rel (0) target = $region13
    $region12: #{fc_base_forward.1} parent=1 // pred_region
      _
    $region13: #{fc_base_forward.1} parent=1 // pred_fallthru
      _
    // Predicated region
    $region14: #{fc_base_forward.1} parent=1 // pred_check
      _
    $region15: #{fc_base_forward.1} parent=1 // pred_check_branch
      %41 = sbr.rel (0) target = $region17
    $region16: #{fc_base_forward.1} parent=1 // pred_region
      %s43 = ssub.s32 2048, 2048
      %44 = vsyncadd [#allocation5], %s43
      %s45 = sshll.u32 [#allocation4], 4
      %s46 = int_to_ptr.vmem [resolvable:$true] %s45
      %51 = dma.hbm_to_vmem [thread:$0]  %s3, 2048, %s46, [#allocation5], 128, 128, 8
    $region17: #{fc_base_forward.1} parent=1 // pred_fallthru
      _
    // Predicated region
    $region18: #{fc_base_forward.1} parent=1 // pred_check
      _
    $region19: #{fc_base_forward.1} parent=1 // pred_check_branch
      %53 = sbr.rel (0) target = $region21
    $region20: #{fc_base_forward.1} parent=1 // pred_region
      _
    $region21: #{fc_base_forward.1} parent=1 // pred_fallthru
      _
    // Predicated region
    $region22: #{fc_base_forward.1} parent=1 // pred_check
      _
    $region23: #{fc_base_forward.1} parent=1 // pred_check_branch
      %55 = sbr.rel (0) target = $region25
    $region24: #{fc_base_forward.1} parent=1 // pred_region
      %s57 = ssub.s32 2048, 2048
      %58 = vsyncadd [#allocation5], %s57
      %s59 = sshll.u32 [#allocation6], 4
      %s60 = int_to_ptr.vmem [resolvable:$true] %s59
      %65 = dma.hbm_to_vmem [thread:$0]  %s5, 2048, %s60, [#allocation5], 128, 128, 8
    $region25: #{fc_base_forward.1} parent=1 // pred_fallthru
      _
    // Predicated region
    $region26: #{fc_base_forward.1} parent=1 // pred_check
      _
    $region27: #{fc_base_forward.1} parent=1 // pred_check_branch
      %67 = sbr.rel (0) target = $region29
    $region28: #{fc_base_forward.1} parent=1 // pred_region
      _
    $region29: #{fc_base_forward.1} parent=1 // pred_fallthru
      _
    // Predicated region
    $region30: #{fc_base_forward.1} parent=1 // pred_check
      _
    $region31: #{fc_base_forward.1} parent=1 // pred_check_branch
      %69 = sbr.rel (0) target = $region33
    $region32: #{fc_base_forward.1} parent=1 // pred_region
      %s71 = ssub.s32 2048, 2048
      %72 = vsyncadd [#allocation8], %s71
      %s73 = sshll.u32 [#allocation7], 4
      %s74 = int_to_ptr.vmem [resolvable:$true] %s73
      %79 = dma.hbm_to_vmem [thread:$0]  %s7, 2048, %s74, [#allocation8], 128, 128, 8
    $region33: #{fc_base_forward.1} parent=1 // pred_fallthru
      _
    // Predicated region
    $region34: #{fc_base_forward.1} parent=1 // pred_check
      _
    $region35: #{fc_base_forward.1} parent=1 // pred_check_branch
      %81 = sbr.rel (0) target = $region37
    $region36: #{fc_base_forward.1} parent=1 // pred_region
      _
    $region37: #{fc_base_forward.1} parent=1 // pred_fallthru
      _
    // Predicated region
    $region38: #{fc_base_forward.1} parent=1 // pred_check
      _
    $region39: #{fc_base_forward.1} parent=1 // pred_check_branch
      %83 = sbr.rel (0) target = $region41
    $region40: #{fc_base_forward.1} parent=1 // pred_region
      %s85 = ssub.s32 2048, 2048
      %86 = vsyncadd [#allocation8], %s85
      %s87 = sshll.u32 [#allocation9], 4
      %s88 = int_to_ptr.vmem [resolvable:$true] %s87
      %93 = dma.hbm_to_vmem [thread:$0]  %s9, 2048, %s88, [#allocation8], 128, 128, 8
    $region41: #{fc_base_forward.1} parent=1 // pred_fallthru
      _
    // Predicated region
    $region42: #{fc_base_forward.1} parent=1 // pred_check
      _
    $region43: #{fc_base_forward.1} parent=1 // pred_check_branch
      %95 = sbr.rel (0) target = $region45
    $region44: #{fc_base_forward.1} parent=1 // pred_region
      _
    $region45: #{fc_base_forward.1} parent=1 // pred_fallthru
      _
    // Predicated region
    $region46: #{fc_base_forward.1} parent=1 // pred_check
      _
    $region47: #{fc_base_forward.1} parent=1 // pred_check_branch
      %97 = sbr.rel (0) target = $region49
    $region48: #{fc_base_forward.1} parent=1 // pred_region
      %s99 = ssub.s32 2048, 2048
      %100 = vsyncadd [#allocation11], %s99
      %s101 = sshll.u32 [#allocation10], 4
      %s102 = int_to_ptr.vmem [resolvable:$true] %s101
      %107 = dma.hbm_to_vmem [thread:$0]  %s11, 2048, %s102, [#allocation11], 128, 128, 8
    $region49: #{fc_base_forward.1} parent=1 // pred_fallthru
      _
    // Predicated region
    $region50: #{fc_base_forward.1} parent=1 // pred_check
      _
    $region51: #{fc_base_forward.1} parent=1 // pred_check_branch
      %109 = sbr.rel (0) target = $region53
    $region52: #{fc_base_forward.1} parent=1 // pred_region
      _
    $region53: #{fc_base_forward.1} parent=1 // pred_fallthru
      _
    // Predicated region
    $region54: #{fc_base_forward.1} parent=1 // pred_check
      _
    $region55: #{fc_base_forward.1} parent=1 // pred_check_branch
      %111 = sbr.rel (0) target = $region57
    $region56: #{fc_base_forward.1} parent=1 // pred_region
      %s113 = ssub.s32 2048, 2048
      %114 = vsyncadd [#allocation11], %s113
      %s115 = sshll.u32 [#allocation12], 4
      %s116 = int_to_ptr.vmem [resolvable:$true] %s115
      %121 = dma.hbm_to_vmem [thread:$0]  %s13, 2048, %s116, [#allocation11], 128, 128, 8
    $region57: #{fc_base_forward.1} parent=1 // pred_fallthru
      _
    // Predicated region
    $region58: #{fc_base_forward.1} parent=1 // pred_check
      _
    $region59: #{fc_base_forward.1} parent=1 // pred_check_branch
      %123 = sbr.rel (0) target = $region61
    $region60: #{fc_base_forward.1} parent=1 // pred_region
      _
    $region61: #{fc_base_forward.1} parent=1 // pred_fallthru
      _
    // Predicated region
    $region62: #{fc_base_forward.1} parent=1 // pred_check
      _
    $region63: #{fc_base_forward.1} parent=1 // pred_check_branch
      %125 = sbr.rel (0) target = $region65
    $region64: #{fc_base_forward.1} parent=1 // pred_region
      %126 = dma.done [#allocation3], 2048
    $region65: #{fc_base_forward.1} parent=1 // pred_fallthru
      _
    // Predicated region
    $region66: #{fc_base_forward.1} parent=1 // pred_check
      _
    $region67: #{fc_base_forward.1} parent=1 // pred_check_branch
      %128 = sbr.rel (0) target = $region69
    $region68: #{fc_base_forward.1} parent=1 // pred_region
      %129 = dma.done [#allocation5], 2048
    $region69: #{fc_base_forward.1} parent=1 // pred_fallthru
      _
    // Predicated region
    $region70: #{fc_base_forward.1} parent=1 // pred_check
      _
    $region71: #{fc_base_forward.1} parent=1 // pred_check_branch
      %131 = sbr.rel (0) target = $region73
    $region72: #{fc_base_forward.1} parent=1 // pred_region
      %132 = dma.done [#allocation5], 2048
    $region73: #{fc_base_forward.1} parent=1 // pred_fallthru
      _
    // Predicated region
    $region74: #{fc_base_forward.1} parent=1 // pred_check
      _
    $region75: #{fc_base_forward.1} parent=1 // pred_check_branch
      %134 = sbr.rel (0) target = $region77
    $region76: #{fc_base_forward.1} parent=1 // pred_region
      %135 = dma.done [#allocation8], 2048
    $region77: #{fc_base_forward.1} parent=1 // pred_fallthru
      _
    // Predicated region
    $region78: #{fc_base_forward.1} parent=1 // pred_check
      _
    $region79: #{fc_base_forward.1} parent=1 // pred_check_branch
      %137 = sbr.rel (0) target = $region81
    $region80: #{fc_base_forward.1} parent=1 // pred_region
      %138 = dma.done [#allocation8], 2048
    $region81: #{fc_base_forward.1} parent=1 // pred_fallthru
      _
    // Predicated region
    $region82: #{fc_base_forward.1} parent=1 // pred_check
      _
    $region83: #{fc_base_forward.1} parent=1 // pred_check_branch
      %140 = sbr.rel (0) target = $region85
    $region84: #{fc_base_forward.1} parent=1 // pred_region
      %141 = dma.done [#allocation11], 2048
    $region85: #{fc_base_forward.1} parent=1 // pred_fallthru
      _
    // Predicated region
    $region86: #{fc_base_forward.1} parent=1 // pred_check
      _
    $region87: #{fc_base_forward.1} parent=1 // pred_check_branch
      %143 = sbr.rel (0) target = $region89
    $region88: #{fc_base_forward.1} parent=1 // pred_region
      %144 = dma.done [#allocation11], 2048
    $region89: #{fc_base_forward.1} parent=1 // pred_fallthru
      _
    %v145 = vld [vmem:[%s0] sm:$0xff]
    %v146 = vld [vmem:[#allocation2] sm:$0xff]
    %v147 = vld [vmem:[#allocation2 + $0x8] sm:$0xff]
    %v148 = vld [vmem:[#allocation2 + $0x10] sm:$0xff]
    %v149 = vld [vmem:[#allocation2 + $0x18] sm:$0xff]
    %v150 = vld [vmem:[#allocation2 + $0x20] sm:$0xff]
    %v151 = vld [vmem:[#allocation2 + $0x28] sm:$0xff]
    %v152 = vld [vmem:[#allocation2 + $0x30] sm:$0xff]
    %v153 = vld [vmem:[#allocation2 + $0x38] sm:$0xff]
    %v154 = vld [vmem:[#allocation2 + $0x40] sm:$0xff]
    %v155 = vld [vmem:[#allocation2 + $0x48] sm:$0xff]
    %v156 = vld [vmem:[#allocation2 + $0x50] sm:$0xff]
    %v157 = vld [vmem:[#allocation2 + $0x58] sm:$0xff]
    %v158 = vld [vmem:[#allocation2 + $0x60] sm:$0xff]
    %v159 = vld [vmem:[#allocation2 + $0x68] sm:$0xff]
    %v160 = vld [vmem:[#allocation2 + $0x70] sm:$0xff]
    %v161 = vld [vmem:[#allocation2 + $0x78] sm:$0xff]
    %v162 = vld [vmem:[%s2] sm:$0x1]
    %v164 = vlaneseq
    %v165 = vshrl.u32 %v164, 7
    %v166 = vsub.s32 0, %v165
    %v167 = vrot.slane %v162, %v166
    %169 = vmatprep.subr.mxu0 0.0
    %170 = vmatpush1.msra.mxu0 %v146
    %171 = vmatprep.subr.mxu0 0.0
    %172 = vmatpush1.msra.mxu0 %v147
    %173 = vmatprep.subr.mxu0 0.0
    %174 = vmatpush1.msra.mxu0 %v148
    %175 = vmatprep.subr.mxu0 0.0
    %176 = vmatpush1.msra.mxu0 %v149
    %177 = vmatprep.subr.mxu0 0.0
    %178 = vmatpush1.msra.mxu0 %v150
    %179 = vmatprep.subr.mxu0 0.0
    %180 = vmatpush1.msra.mxu0 %v151
    %181 = vmatprep.subr.mxu0 0.0
    %182 = vmatpush1.msra.mxu0 %v152
    %183 = vmatprep.subr.mxu0 0.0
    %184 = vmatpush1.msra.mxu0 %v153
    %185 = vmatprep.subr.mxu0 0.0
    %186 = vmatpush1.msra.mxu0 %v154
    %187 = vmatprep.subr.mxu0 0.0
    %188 = vmatpush1.msra.mxu0 %v155
    %189 = vmatprep.subr.mxu0 0.0
    %190 = vmatpush1.msra.mxu0 %v156
    %191 = vmatprep.subr.mxu0 0.0
    %192 = vmatpush1.msra.mxu0 %v157
    %193 = vmatprep.subr.mxu0 0.0
    %194 = vmatpush1.msra.mxu0 %v158
    %195 = vmatprep.subr.mxu0 0.0
    %196 = vmatpush1.msra.mxu0 %v159
    %197 = vmatprep.subr.mxu0 0.0
    %198 = vmatpush1.msra.mxu0 %v160
    %199 = vmatprep.subr.mxu0 0.0
    %200 = vmatpush1.msra.mxu0 %v161
    %201 = vmatprep.subr.mxu0 0.0
    %202 = vmatpush1.msra.mxu0 0.0
    %203 = vmatprep.subr.mxu0 0.0
    %204 = vmatpush1.msra.mxu0 0.0
    %205 = vmatprep.subr.mxu0 0.0
    %206 = vmatpush1.msra.mxu0 0.0
    %207 = vmatprep.subr.mxu0 0.0
    %208 = vmatpush1.msra.mxu0 0.0
    %209 = vmatprep.subr.mxu0 0.0
    %210 = vmatpush1.msra.mxu0 0.0
    %211 = vmatprep.subr.mxu0 0.0
    %212 = vmatpush1.msra.mxu0 0.0
    %213 = vmatprep.subr.mxu0 0.0
    %214 = vmatpush1.msra.mxu0 0.0
    %215 = vmatprep.subr.mxu0 0.0
    %216 = vmatpush1.msra.mxu0 0.0
    %217 = vmatprep.subr.mxu0 0.0
    %218 = vmatpush1.msra.mxu0 0.0
    %219 = vmatprep.subr.mxu0 0.0
    %220 = vmatpush1.msra.mxu0 0.0
    %221 = vmatprep.subr.mxu0 0.0
    %222 = vmatpush1.msra.mxu0 0.0
    %223 = vmatprep.subr.mxu0 0.0
    %224 = vmatpush1.msra.mxu0 0.0
    %225 = vmatprep.subr.mxu0 0.0
    %226 = vmatpush1.msra.mxu0 0.0
    %227 = vmatprep.subr.mxu0 0.0
    %228 = vmatpush1.msra.mxu0 0.0
    %229 = vmatprep.subr.mxu0 0.0
    %230 = vmatpush1.msra.mxu0 0.0
    %231 = vmatprep.subr.mxu0 0.0
    %232 = vmatpush1.msra.mxu0 0.0
    %233 = vmatprep.mubr.f32.mxu0 0.0
    %234 = vmatmul.mubr.f32.gmra.mrb[0].mxu0 %v145
    %v235 = vpop.f32.mrb[0].mxu0
    %v236 = vadd.f32 %v167, %v235
    %v237 = vpop.f32.mrb[0].mxu0
    %238 = vdwg.mxu0
    %v239 = vmax.f32 %v236, 0.0
    %v240 = vld [vmem:[#allocation4] sm:$0xff]
    %v241 = vld [vmem:[#allocation4 + $0x8] sm:$0xff]
    %v242 = vld [vmem:[#allocation4 + $0x10] sm:$0xff]
    %v243 = vld [vmem:[#allocation4 + $0x18] sm:$0xff]
    %v244 = vld [vmem:[#allocation4 + $0x20] sm:$0xff]
    %v245 = vld [vmem:[#allocation4 + $0x28] sm:$0xff]
    %v246 = vld [vmem:[#allocation4 + $0x30] sm:$0xff]
    %v247 = vld [vmem:[#allocation4 + $0x38] sm:$0xff]
    %v248 = vld [vmem:[#allocation4 + $0x40] sm:$0xff]
    %v249 = vld [vmem:[#allocation4 + $0x48] sm:$0xff]
    %v250 = vld [vmem:[#allocation4 + $0x50] sm:$0xff]
    %v251 = vld [vmem:[#allocation4 + $0x58] sm:$0xff]
    %v252 = vld [vmem:[#allocation4 + $0x60] sm:$0xff]
    %v253 = vld [vmem:[#allocation4 + $0x68] sm:$0xff]
    %v254 = vld [vmem:[#allocation4 + $0x70] sm:$0xff]
    %v255 = vld [vmem:[#allocation4 + $0x78] sm:$0xff]
    %v256 = vld [vmem:[%s4] sm:$0x1]
    %v258 = vlaneseq
    %v259 = vshrl.u32 %v258, 7
    %v260 = vsub.s32 0, %v259
    %v261 = vrot.slane %v256, %v260
    %263 = vmatprep.subr.mxu0 0.0
    %264 = vmatpush1.msra.mxu0 %v240
    %265 = vmatprep.subr.mxu0 0.0
    %266 = vmatpush1.msra.mxu0 %v241
    %267 = vmatprep.subr.mxu0 0.0
    %268 = vmatpush1.msra.mxu0 %v242
    %269 = vmatprep.subr.mxu0 0.0
    %270 = vmatpush1.msra.mxu0 %v243
    %271 = vmatprep.subr.mxu0 0.0
    %272 = vmatpush1.msra.mxu0 %v244
    %273 = vmatprep.subr.mxu0 0.0
    %274 = vmatpush1.msra.mxu0 %v245
    %275 = vmatprep.subr.mxu0 0.0
    %276 = vmatpush1.msra.mxu0 %v246
    %277 = vmatprep.subr.mxu0 0.0
    %278 = vmatpush1.msra.mxu0 %v247
    %279 = vmatprep.subr.mxu0 0.0
    %280 = vmatpush1.msra.mxu0 %v248
    %281 = vmatprep.subr.mxu0 0.0
    %282 = vmatpush1.msra.mxu0 %v249
    %283 = vmatprep.subr.mxu0 0.0
    %284 = vmatpush1.msra.mxu0 %v250
    %285 = vmatprep.subr.mxu0 0.0
    %286 = vmatpush1.msra.mxu0 %v251
    %287 = vmatprep.subr.mxu0 0.0
    %288 = vmatpush1.msra.mxu0 %v252
    %289 = vmatprep.subr.mxu0 0.0
    %290 = vmatpush1.msra.mxu0 %v253
    %291 = vmatprep.subr.mxu0 0.0
    %292 = vmatpush1.msra.mxu0 %v254
    %293 = vmatprep.subr.mxu0 0.0
    %294 = vmatpush1.msra.mxu0 %v255
    %295 = vmatprep.subr.mxu0 0.0
    %296 = vmatpush1.msra.mxu0 0.0
    %297 = vmatprep.subr.mxu0 0.0
    %298 = vmatpush1.msra.mxu0 0.0
    %299 = vmatprep.subr.mxu0 0.0
    %300 = vmatpush1.msra.mxu0 0.0
    %301 = vmatprep.subr.mxu0 0.0
    %302 = vmatpush1.msra.mxu0 0.0
    %303 = vmatprep.subr.mxu0 0.0
    %304 = vmatpush1.msra.mxu0 0.0
    %305 = vmatprep.subr.mxu0 0.0
    %306 = vmatpush1.msra.mxu0 0.0
    %307 = vmatprep.subr.mxu0 0.0
    %308 = vmatpush1.msra.mxu0 0.0
    %309 = vmatprep.subr.mxu0 0.0
    %310 = vmatpush1.msra.mxu0 0.0
    %311 = vmatprep.subr.mxu0 0.0
    %312 = vmatpush1.msra.mxu0 0.0
    %313 = vmatprep.subr.mxu0 0.0
    %314 = vmatpush1.msra.mxu0 0.0
    %315 = vmatprep.subr.mxu0 0.0
    %316 = vmatpush1.msra.mxu0 0.0
    %317 = vmatprep.subr.mxu0 0.0
    %318 = vmatpush1.msra.mxu0 0.0
    %319 = vmatprep.subr.mxu0 0.0
    %320 = vmatpush1.msra.mxu0 0.0
    %321 = vmatprep.subr.mxu0 0.0
    %322 = vmatpush1.msra.mxu0 0.0
    %323 = vmatprep.subr.mxu0 0.0
    %324 = vmatpush1.msra.mxu0 0.0
    %325 = vmatprep.subr.mxu0 0.0
    %326 = vmatpush1.msra.mxu0 0.0
    %327 = vmatprep.mubr.f32.mxu0 0.0
    %328 = vmatmul.mubr.f32.gmra.mrb[0].mxu0 %v239
    %v329 = vpop.f32.mrb[0].mxu0
    %v330 = vadd.f32 %v261, %v329
    %v331 = vpop.f32.mrb[0].mxu0
    %332 = vdwg.mxu0
    %v333 = vmax.f32 %v330, 0.0
    %v334 = vld [vmem:[#allocation6] sm:$0xff]
    %v335 = vld [vmem:[#allocation6 + $0x8] sm:$0xff]
    %v336 = vld [vmem:[#allocation6 + $0x10] sm:$0xff]
    %v337 = vld [vmem:[#allocation6 + $0x18] sm:$0xff]
    %v338 = vld [vmem:[#allocation6 + $0x20] sm:$0xff]
    %v339 = vld [vmem:[#allocation6 + $0x28] sm:$0xff]
    %v340 = vld [vmem:[#allocation6 + $0x30] sm:$0xff]
    %v341 = vld [vmem:[#allocation6 + $0x38] sm:$0xff]
    %v342 = vld [vmem:[#allocation6 + $0x40] sm:$0xff]
    %v343 = vld [vmem:[#allocation6 + $0x48] sm:$0xff]
    %v344 = vld [vmem:[#allocation6 + $0x50] sm:$0xff]
    %v345 = vld [vmem:[#allocation6 + $0x58] sm:$0xff]
    %v346 = vld [vmem:[#allocation6 + $0x60] sm:$0xff]
    %v347 = vld [vmem:[#allocation6 + $0x68] sm:$0xff]
    %v348 = vld [vmem:[#allocation6 + $0x70] sm:$0xff]
    %v349 = vld [vmem:[#allocation6 + $0x78] sm:$0xff]
    %v350 = vld [vmem:[%s6] sm:$0x1]
    %v352 = vlaneseq
    %v353 = vshrl.u32 %v352, 7
    %v354 = vsub.s32 0, %v353
    %v355 = vrot.slane %v350, %v354
    %357 = vmatprep.subr.mxu0 0.0
    %358 = vmatpush1.msra.mxu0 %v334
    %359 = vmatprep.subr.mxu0 0.0
    %360 = vmatpush1.msra.mxu0 %v335
    %361 = vmatprep.subr.mxu0 0.0
    %362 = vmatpush1.msra.mxu0 %v336
    %363 = vmatprep.subr.mxu0 0.0
    %364 = vmatpush1.msra.mxu0 %v337
    %365 = vmatprep.subr.mxu0 0.0
    %366 = vmatpush1.msra.mxu0 %v338
    %367 = vmatprep.subr.mxu0 0.0
    %368 = vmatpush1.msra.mxu0 %v339
    %369 = vmatprep.subr.mxu0 0.0
    %370 = vmatpush1.msra.mxu0 %v340
    %371 = vmatprep.subr.mxu0 0.0
    %372 = vmatpush1.msra.mxu0 %v341
    %373 = vmatprep.subr.mxu0 0.0
    %374 = vmatpush1.msra.mxu0 %v342
    %375 = vmatprep.subr.mxu0 0.0
    %376 = vmatpush1.msra.mxu0 %v343
    %377 = vmatprep.subr.mxu0 0.0
    %378 = vmatpush1.msra.mxu0 %v344
    %379 = vmatprep.subr.mxu0 0.0
    %380 = vmatpush1.msra.mxu0 %v345
    %381 = vmatprep.subr.mxu0 0.0
    %382 = vmatpush1.msra.mxu0 %v346
    %383 = vmatprep.subr.mxu0 0.0
    %384 = vmatpush1.msra.mxu0 %v347
    %385 = vmatprep.subr.mxu0 0.0
    %386 = vmatpush1.msra.mxu0 %v348
    %387 = vmatprep.subr.mxu0 0.0
    %388 = vmatpush1.msra.mxu0 %v349
    %389 = vmatprep.subr.mxu0 0.0
    %390 = vmatpush1.msra.mxu0 0.0
    %391 = vmatprep.subr.mxu0 0.0
    %392 = vmatpush1.msra.mxu0 0.0
    %393 = vmatprep.subr.mxu0 0.0
    %394 = vmatpush1.msra.mxu0 0.0
    %395 = vmatprep.subr.mxu0 0.0
    %396 = vmatpush1.msra.mxu0 0.0
    %397 = vmatprep.subr.mxu0 0.0
    %398 = vmatpush1.msra.mxu0 0.0
    %399 = vmatprep.subr.mxu0 0.0
    %400 = vmatpush1.msra.mxu0 0.0
    %401 = vmatprep.subr.mxu0 0.0
    %402 = vmatpush1.msra.mxu0 0.0
    %403 = vmatprep.subr.mxu0 0.0
    %404 = vmatpush1.msra.mxu0 0.0
    %405 = vmatprep.subr.mxu0 0.0
    %406 = vmatpush1.msra.mxu0 0.0
    %407 = vmatprep.subr.mxu0 0.0
    %408 = vmatpush1.msra.mxu0 0.0
    %409 = vmatprep.subr.mxu0 0.0
    %410 = vmatpush1.msra.mxu0 0.0
    %411 = vmatprep.subr.mxu0 0.0
    %412 = vmatpush1.msra.mxu0 0.0
    %413 = vmatprep.subr.mxu0 0.0
    %414 = vmatpush1.msra.mxu0 0.0
    %415 = vmatprep.subr.mxu0 0.0
    %416 = vmatpush1.msra.mxu0 0.0
    %417 = vmatprep.subr.mxu0 0.0
    %418 = vmatpush1.msra.mxu0 0.0
    %419 = vmatprep.subr.mxu0 0.0
    %420 = vmatpush1.msra.mxu0 0.0
    %421 = vmatprep.mubr.f32.mxu0 0.0
    %422 = vmatmul.mubr.f32.gmra.mrb[0].mxu0 %v333
    %v423 = vpop.f32.mrb[0].mxu0
    %v424 = vadd.f32 %v355, %v423
    %v425 = vpop.f32.mrb[0].mxu0
    %426 = vdwg.mxu0
    %v427 = vmax.f32 %v424, 0.0
    %v428 = vld [vmem:[#allocation7] sm:$0xff]
    %v429 = vld [vmem:[#allocation7 + $0x8] sm:$0xff]
    %v430 = vld [vmem:[#allocation7 + $0x10] sm:$0xff]
    %v431 = vld [vmem:[#allocation7 + $0x18] sm:$0xff]
    %v432 = vld [vmem:[#allocation7 + $0x20] sm:$0xff]
    %v433 = vld [vmem:[#allocation7 + $0x28] sm:$0xff]
    %v434 = vld [vmem:[#allocation7 + $0x30] sm:$0xff]
    %v435 = vld [vmem:[#allocation7 + $0x38] sm:$0xff]
    %v436 = vld [vmem:[#allocation7 + $0x40] sm:$0xff]
    %v437 = vld [vmem:[#allocation7 + $0x48] sm:$0xff]
    %v438 = vld [vmem:[#allocation7 + $0x50] sm:$0xff]
    %v439 = vld [vmem:[#allocation7 + $0x58] sm:$0xff]
    %v440 = vld [vmem:[#allocation7 + $0x60] sm:$0xff]
    %v441 = vld [vmem:[#allocation7 + $0x68] sm:$0xff]
    %v442 = vld [vmem:[#allocation7 + $0x70] sm:$0xff]
    %v443 = vld [vmem:[#allocation7 + $0x78] sm:$0xff]
    %v444 = vld [vmem:[%s8] sm:$0x1]
    %v446 = vlaneseq
    %v447 = vshrl.u32 %v446, 7
    %v448 = vsub.s32 0, %v447
    %v449 = vrot.slane %v444, %v448
    %451 = vmatprep.subr.mxu0 0.0
    %452 = vmatpush1.msra.mxu0 %v428
    %453 = vmatprep.subr.mxu0 0.0
    %454 = vmatpush1.msra.mxu0 %v429
    %455 = vmatprep.subr.mxu0 0.0
    %456 = vmatpush1.msra.mxu0 %v430
    %457 = vmatprep.subr.mxu0 0.0
    %458 = vmatpush1.msra.mxu0 %v431
    %459 = vmatprep.subr.mxu0 0.0
    %460 = vmatpush1.msra.mxu0 %v432
    %461 = vmatprep.subr.mxu0 0.0
    %462 = vmatpush1.msra.mxu0 %v433
    %463 = vmatprep.subr.mxu0 0.0
    %464 = vmatpush1.msra.mxu0 %v434
    %465 = vmatprep.subr.mxu0 0.0
    %466 = vmatpush1.msra.mxu0 %v435
    %467 = vmatprep.subr.mxu0 0.0
    %468 = vmatpush1.msra.mxu0 %v436
    %469 = vmatprep.subr.mxu0 0.0
    %470 = vmatpush1.msra.mxu0 %v437
    %471 = vmatprep.subr.mxu0 0.0
    %472 = vmatpush1.msra.mxu0 %v438
    %473 = vmatprep.subr.mxu0 0.0
    %474 = vmatpush1.msra.mxu0 %v439
    %475 = vmatprep.subr.mxu0 0.0
    %476 = vmatpush1.msra.mxu0 %v440
    %477 = vmatprep.subr.mxu0 0.0
    %478 = vmatpush1.msra.mxu0 %v441
    %479 = vmatprep.subr.mxu0 0.0
    %480 = vmatpush1.msra.mxu0 %v442
    %481 = vmatprep.subr.mxu0 0.0
    %482 = vmatpush1.msra.mxu0 %v443
    %483 = vmatprep.subr.mxu0 0.0
    %484 = vmatpush1.msra.mxu0 0.0
    %485 = vmatprep.subr.mxu0 0.0
    %486 = vmatpush1.msra.mxu0 0.0
    %487 = vmatprep.subr.mxu0 0.0
    %488 = vmatpush1.msra.mxu0 0.0
    %489 = vmatprep.subr.mxu0 0.0
    %490 = vmatpush1.msra.mxu0 0.0
    %491 = vmatprep.subr.mxu0 0.0
    %492 = vmatpush1.msra.mxu0 0.0
    %493 = vmatprep.subr.mxu0 0.0
    %494 = vmatpush1.msra.mxu0 0.0
    %495 = vmatprep.subr.mxu0 0.0
    %496 = vmatpush1.msra.mxu0 0.0
    %497 = vmatprep.subr.mxu0 0.0
    %498 = vmatpush1.msra.mxu0 0.0
    %499 = vmatprep.subr.mxu0 0.0
    %500 = vmatpush1.msra.mxu0 0.0
    %501 = vmatprep.subr.mxu0 0.0
    %502 = vmatpush1.msra.mxu0 0.0
    %503 = vmatprep.subr.mxu0 0.0
    %504 = vmatpush1.msra.mxu0 0.0
    %505 = vmatprep.subr.mxu0 0.0
    %506 = vmatpush1.msra.mxu0 0.0
    %507 = vmatprep.subr.mxu0 0.0
    %508 = vmatpush1.msra.mxu0 0.0
    %509 = vmatprep.subr.mxu0 0.0
    %510 = vmatpush1.msra.mxu0 0.0
    %511 = vmatprep.subr.mxu0 0.0
    %512 = vmatpush1.msra.mxu0 0.0
    %513 = vmatprep.subr.mxu0 0.0
    %514 = vmatpush1.msra.mxu0 0.0
    %515 = vmatprep.mubr.f32.mxu0 0.0
    %516 = vmatmul.mubr.f32.gmra.mrb[0].mxu0 %v427
    %v517 = vpop.f32.mrb[0].mxu0
    %v518 = vadd.f32 %v449, %v517
    %v519 = vpop.f32.mrb[0].mxu0
    %520 = vdwg.mxu0
    %v521 = vmax.f32 %v518, 0.0
    %v522 = vld [vmem:[#allocation9] sm:$0xff]
    %v523 = vld [vmem:[#allocation9 + $0x8] sm:$0xff]
    %v524 = vld [vmem:[#allocation9 + $0x10] sm:$0xff]
    %v525 = vld [vmem:[#allocation9 + $0x18] sm:$0xff]
    %v526 = vld [vmem:[#allocation9 + $0x20] sm:$0xff]
    %v527 = vld [vmem:[#allocation9 + $0x28] sm:$0xff]
    %v528 = vld [vmem:[#allocation9 + $0x30] sm:$0xff]
    %v529 = vld [vmem:[#allocation9 + $0x38] sm:$0xff]
    %v530 = vld [vmem:[#allocation9 + $0x40] sm:$0xff]
    %v531 = vld [vmem:[#allocation9 + $0x48] sm:$0xff]
    %v532 = vld [vmem:[#allocation9 + $0x50] sm:$0xff]
    %v533 = vld [vmem:[#allocation9 + $0x58] sm:$0xff]
    %v534 = vld [vmem:[#allocation9 + $0x60] sm:$0xff]
    %v535 = vld [vmem:[#allocation9 + $0x68] sm:$0xff]
    %v536 = vld [vmem:[#allocation9 + $0x70] sm:$0xff]
    %v537 = vld [vmem:[#allocation9 + $0x78] sm:$0xff]
    %v538 = vld [vmem:[%s10] sm:$0x1]
    %v540 = vlaneseq
    %v541 = vshrl.u32 %v540, 7
    %v542 = vsub.s32 0, %v541
    %v543 = vrot.slane %v538, %v542
    %545 = vmatprep.subr.mxu0 0.0
    %546 = vmatpush1.msra.mxu0 %v522
    %547 = vmatprep.subr.mxu0 0.0
    %548 = vmatpush1.msra.mxu0 %v523
    %549 = vmatprep.subr.mxu0 0.0
    %550 = vmatpush1.msra.mxu0 %v524
    %551 = vmatprep.subr.mxu0 0.0
    %552 = vmatpush1.msra.mxu0 %v525
    %553 = vmatprep.subr.mxu0 0.0
    %554 = vmatpush1.msra.mxu0 %v526
    %555 = vmatprep.subr.mxu0 0.0
    %556 = vmatpush1.msra.mxu0 %v527
    %557 = vmatprep.subr.mxu0 0.0
    %558 = vmatpush1.msra.mxu0 %v528
    %559 = vmatprep.subr.mxu0 0.0
    %560 = vmatpush1.msra.mxu0 %v529
    %561 = vmatprep.subr.mxu0 0.0
    %562 = vmatpush1.msra.mxu0 %v530
    %563 = vmatprep.subr.mxu0 0.0
    %564 = vmatpush1.msra.mxu0 %v531
    %565 = vmatprep.subr.mxu0 0.0
    %566 = vmatpush1.msra.mxu0 %v532
    %567 = vmatprep.subr.mxu0 0.0
    %568 = vmatpush1.msra.mxu0 %v533
    %569 = vmatprep.subr.mxu0 0.0
    %570 = vmatpush1.msra.mxu0 %v534
    %571 = vmatprep.subr.mxu0 0.0
    %572 = vmatpush1.msra.mxu0 %v535
    %573 = vmatprep.subr.mxu0 0.0
    %574 = vmatpush1.msra.mxu0 %v536
    %575 = vmatprep.subr.mxu0 0.0
    %576 = vmatpush1.msra.mxu0 %v537
    %577 = vmatprep.subr.mxu0 0.0
    %578 = vmatpush1.msra.mxu0 0.0
    %579 = vmatprep.subr.mxu0 0.0
    %580 = vmatpush1.msra.mxu0 0.0
    %581 = vmatprep.subr.mxu0 0.0
    %582 = vmatpush1.msra.mxu0 0.0
    %583 = vmatprep.subr.mxu0 0.0
    %584 = vmatpush1.msra.mxu0 0.0
    %585 = vmatprep.subr.mxu0 0.0
    %586 = vmatpush1.msra.mxu0 0.0
    %587 = vmatprep.subr.mxu0 0.0
    %588 = vmatpush1.msra.mxu0 0.0
    %589 = vmatprep.subr.mxu0 0.0
    %590 = vmatpush1.msra.mxu0 0.0
    %591 = vmatprep.subr.mxu0 0.0
    %592 = vmatpush1.msra.mxu0 0.0
    %593 = vmatprep.subr.mxu0 0.0
    %594 = vmatpush1.msra.mxu0 0.0
    %595 = vmatprep.subr.mxu0 0.0
    %596 = vmatpush1.msra.mxu0 0.0
    %597 = vmatprep.subr.mxu0 0.0
    %598 = vmatpush1.msra.mxu0 0.0
    %599 = vmatprep.subr.mxu0 0.0
    %600 = vmatpush1.msra.mxu0 0.0
    %601 = vmatprep.subr.mxu0 0.0
    %602 = vmatpush1.msra.mxu0 0.0
    %603 = vmatprep.subr.mxu0 0.0
    %604 = vmatpush1.msra.mxu0 0.0
    %605 = vmatprep.subr.mxu0 0.0
    %606 = vmatpush1.msra.mxu0 0.0
    %607 = vmatprep.subr.mxu0 0.0
    %608 = vmatpush1.msra.mxu0 0.0
    %609 = vmatprep.mubr.f32.mxu0 0.0
    %610 = vmatmul.mubr.f32.gmra.mrb[0].mxu0 %v521
    %v611 = vpop.f32.mrb[0].mxu0
    %v612 = vadd.f32 %v543, %v611
    %v613 = vpop.f32.mrb[0].mxu0
    %614 = vdwg.mxu0
    %v615 = vmax.f32 %v612, 0.0
    %v616 = vld [vmem:[#allocation10] sm:$0xff]
    %v617 = vld [vmem:[#allocation10 + $0x8] sm:$0xff]
    %v618 = vld [vmem:[#allocation10 + $0x10] sm:$0xff]
    %v619 = vld [vmem:[#allocation10 + $0x18] sm:$0xff]
    %v620 = vld [vmem:[#allocation10 + $0x20] sm:$0xff]
    %v621 = vld [vmem:[#allocation10 + $0x28] sm:$0xff]
    %v622 = vld [vmem:[#allocation10 + $0x30] sm:$0xff]
    %v623 = vld [vmem:[#allocation10 + $0x38] sm:$0xff]
    %v624 = vld [vmem:[#allocation10 + $0x40] sm:$0xff]
    %v625 = vld [vmem:[#allocation10 + $0x48] sm:$0xff]
    %v626 = vld [vmem:[#allocation10 + $0x50] sm:$0xff]
    %v627 = vld [vmem:[#allocation10 + $0x58] sm:$0xff]
    %v628 = vld [vmem:[#allocation10 + $0x60] sm:$0xff]
    %v629 = vld [vmem:[#allocation10 + $0x68] sm:$0xff]
    %v630 = vld [vmem:[#allocation10 + $0x70] sm:$0xff]
    %v631 = vld [vmem:[#allocation10 + $0x78] sm:$0xff]
    %v632 = vld [vmem:[%s12] sm:$0x1]
    %v634 = vlaneseq
    %v635 = vshrl.u32 %v634, 7
    %v636 = vsub.s32 0, %v635
    %v637 = vrot.slane %v632, %v636
    %639 = vmatprep.subr.mxu0 0.0
    %640 = vmatpush1.msra.mxu0 %v616
    %641 = vmatprep.subr.mxu0 0.0
    %642 = vmatpush1.msra.mxu0 %v617
    %643 = vmatprep.subr.mxu0 0.0
    %644 = vmatpush1.msra.mxu0 %v618
    %645 = vmatprep.subr.mxu0 0.0
    %646 = vmatpush1.msra.mxu0 %v619
    %647 = vmatprep.subr.mxu0 0.0
    %648 = vmatpush1.msra.mxu0 %v620
    %649 = vmatprep.subr.mxu0 0.0
    %650 = vmatpush1.msra.mxu0 %v621
    %651 = vmatprep.subr.mxu0 0.0
    %652 = vmatpush1.msra.mxu0 %v622
    %653 = vmatprep.subr.mxu0 0.0
    %654 = vmatpush1.msra.mxu0 %v623
    %655 = vmatprep.subr.mxu0 0.0
    %656 = vmatpush1.msra.mxu0 %v624
    %657 = vmatprep.subr.mxu0 0.0
    %658 = vmatpush1.msra.mxu0 %v625
    %659 = vmatprep.subr.mxu0 0.0
    %660 = vmatpush1.msra.mxu0 %v626
    %661 = vmatprep.subr.mxu0 0.0
    %662 = vmatpush1.msra.mxu0 %v627
    %663 = vmatprep.subr.mxu0 0.0
    %664 = vmatpush1.msra.mxu0 %v628
    %665 = vmatprep.subr.mxu0 0.0
    %666 = vmatpush1.msra.mxu0 %v629
    %667 = vmatprep.subr.mxu0 0.0
    %668 = vmatpush1.msra.mxu0 %v630
    %669 = vmatprep.subr.mxu0 0.0
    %670 = vmatpush1.msra.mxu0 %v631
    %671 = vmatprep.subr.mxu0 0.0
    %672 = vmatpush1.msra.mxu0 0.0
    %673 = vmatprep.subr.mxu0 0.0
    %674 = vmatpush1.msra.mxu0 0.0
    %675 = vmatprep.subr.mxu0 0.0
    %676 = vmatpush1.msra.mxu0 0.0
    %677 = vmatprep.subr.mxu0 0.0
    %678 = vmatpush1.msra.mxu0 0.0
    %679 = vmatprep.subr.mxu0 0.0
    %680 = vmatpush1.msra.mxu0 0.0
    %681 = vmatprep.subr.mxu0 0.0
    %682 = vmatpush1.msra.mxu0 0.0
    %683 = vmatprep.subr.mxu0 0.0
    %684 = vmatpush1.msra.mxu0 0.0
    %685 = vmatprep.subr.mxu0 0.0
    %686 = vmatpush1.msra.mxu0 0.0
    %687 = vmatprep.subr.mxu0 0.0
    %688 = vmatpush1.msra.mxu0 0.0
    %689 = vmatprep.subr.mxu0 0.0
    %690 = vmatpush1.msra.mxu0 0.0
    %691 = vmatprep.subr.mxu0 0.0
    %692 = vmatpush1.msra.mxu0 0.0
    %693 = vmatprep.subr.mxu0 0.0
    %694 = vmatpush1.msra.mxu0 0.0
    %695 = vmatprep.subr.mxu0 0.0
    %696 = vmatpush1.msra.mxu0 0.0
    %697 = vmatprep.subr.mxu0 0.0
    %698 = vmatpush1.msra.mxu0 0.0
    %699 = vmatprep.subr.mxu0 0.0
    %700 = vmatpush1.msra.mxu0 0.0
    %701 = vmatprep.subr.mxu0 0.0
    %702 = vmatpush1.msra.mxu0 0.0
    %703 = vmatprep.mubr.f32.mxu0 0.0
    %704 = vmatmul.mubr.f32.gmra.mrb[0].mxu0 %v615
    %v705 = vpop.f32.mrb[0].mxu0
    %v706 = vadd.f32 %v637, %v705
    %v707 = vpop.f32.mrb[0].mxu0
    %708 = vdwg.mxu0
    %v709 = vmax.f32 %v706, 0.0
    %v710 = vld [vmem:[#allocation12] sm:$0xff]
    %v711 = vld [vmem:[#allocation12 + $0x8] sm:$0xff]
    %v712 = vld [vmem:[#allocation12 + $0x10] sm:$0xff]
    %v713 = vld [vmem:[#allocation12 + $0x18] sm:$0xff]
    %v714 = vld [vmem:[#allocation12 + $0x20] sm:$0xff]
    %v715 = vld [vmem:[#allocation12 + $0x28] sm:$0xff]
    %v716 = vld [vmem:[#allocation12 + $0x30] sm:$0xff]
    %v717 = vld [vmem:[#allocation12 + $0x38] sm:$0xff]
    %v718 = vld [vmem:[#allocation12 + $0x40] sm:$0xff]
    %v719 = vld [vmem:[#allocation12 + $0x48] sm:$0xff]
    %v720 = vld [vmem:[#allocation12 + $0x50] sm:$0xff]
    %v721 = vld [vmem:[#allocation12 + $0x58] sm:$0xff]
    %v722 = vld [vmem:[#allocation12 + $0x60] sm:$0xff]
    %v723 = vld [vmem:[#allocation12 + $0x68] sm:$0xff]
    %v724 = vld [vmem:[#allocation12 + $0x70] sm:$0xff]
    %v725 = vld [vmem:[#allocation12 + $0x78] sm:$0xff]
    %v726 = vld [vmem:[%s14] sm:$0x1]
    %v728 = vlaneseq
    %v729 = vshrl.u32 %v728, 7
    %v730 = vsub.s32 0, %v729
    %v731 = vrot.slane %v726, %v730
    %733 = vmatprep.subr.mxu0 0.0
    %734 = vmatpush1.msra.mxu0 %v710
    %735 = vmatprep.subr.mxu0 0.0
    %736 = vmatpush1.msra.mxu0 %v711
    %737 = vmatprep.subr.mxu0 0.0
    %738 = vmatpush1.msra.mxu0 %v712
    %739 = vmatprep.subr.mxu0 0.0
    %740 = vmatpush1.msra.mxu0 %v713
    %741 = vmatprep.subr.mxu0 0.0
    %742 = vmatpush1.msra.mxu0 %v714
    %743 = vmatprep.subr.mxu0 0.0
    %744 = vmatpush1.msra.mxu0 %v715
    %745 = vmatprep.subr.mxu0 0.0
    %746 = vmatpush1.msra.mxu0 %v716
    %747 = vmatprep.subr.mxu0 0.0
    %748 = vmatpush1.msra.mxu0 %v717
    %749 = vmatprep.subr.mxu0 0.0
    %750 = vmatpush1.msra.mxu0 %v718
    %751 = vmatprep.subr.mxu0 0.0
    %752 = vmatpush1.msra.mxu0 %v719
    %753 = vmatprep.subr.mxu0 0.0
    %754 = vmatpush1.msra.mxu0 %v720
    %755 = vmatprep.subr.mxu0 0.0
    %756 = vmatpush1.msra.mxu0 %v721
    %757 = vmatprep.subr.mxu0 0.0
    %758 = vmatpush1.msra.mxu0 %v722
    %759 = vmatprep.subr.mxu0 0.0
    %760 = vmatpush1.msra.mxu0 %v723
    %761 = vmatprep.subr.mxu0 0.0
    %762 = vmatpush1.msra.mxu0 %v724
    %763 = vmatprep.subr.mxu0 0.0
    %764 = vmatpush1.msra.mxu0 %v725
    %765 = vmatprep.subr.mxu0 0.0
    %766 = vmatpush1.msra.mxu0 0.0
    %767 = vmatprep.subr.mxu0 0.0
    %768 = vmatpush1.msra.mxu0 0.0
    %769 = vmatprep.subr.mxu0 0.0
    %770 = vmatpush1.msra.mxu0 0.0
    %771 = vmatprep.subr.mxu0 0.0
    %772 = vmatpush1.msra.mxu0 0.0
    %773 = vmatprep.subr.mxu0 0.0
    %774 = vmatpush1.msra.mxu0 0.0
    %775 = vmatprep.subr.mxu0 0.0
    %776 = vmatpush1.msra.mxu0 0.0
    %777 = vmatprep.subr.mxu0 0.0
    %778 = vmatpush1.msra.mxu0 0.0
    %779 = vmatprep.subr.mxu0 0.0
    %780 = vmatpush1.msra.mxu0 0.0
    %781 = vmatprep.subr.mxu0 0.0
    %782 = vmatpush1.msra.mxu0 0.0
    %783 = vmatprep.subr.mxu0 0.0
    %784 = vmatpush1.msra.mxu0 0.0
    %785 = vmatprep.subr.mxu0 0.0
    %786 = vmatpush1.msra.mxu0 0.0
    %787 = vmatprep.subr.mxu0 0.0
    %788 = vmatpush1.msra.mxu0 0.0
    %789 = vmatprep.subr.mxu0 0.0
    %790 = vmatpush1.msra.mxu0 0.0
    %791 = vmatprep.subr.mxu0 0.0
    %792 = vmatpush1.msra.mxu0 0.0
    %793 = vmatprep.subr.mxu0 0.0
    %794 = vmatpush1.msra.mxu0 0.0
    %795 = vmatprep.subr.mxu0 0.0
    %796 = vmatpush1.msra.mxu0 0.0
    %797 = vmatprep.mubr.f32.mxu0 0.0
    %798 = vmatmul.mubr.f32.gmra.mrb[0].mxu0 %v709
    %v799 = vpop.f32.mrb[0].mxu0
    %v800 = vadd.f32 %v731, %v799
    %v801 = vpop.f32.mrb[0].mxu0
    %802 = vdwg.mxu0
    %803 = vst [vmem:[%s15] sm:$0xff] %v800
    // Predicated region
    $region90: #{fc_base_forward.1} parent=1 // pred_check
      _
    $region91: #{fc_base_forward.1} parent=1 // pred_check_branch
      %805 = sbr.rel (0) target = $region93
    $region92: #{fc_base_forward.1} parent=1 // pred_region
      _
    $region93: #{fc_base_forward.1} parent=1 // pred_fallthru
      _
    // Predicated region
    $region94: #{fc_base_forward.1} parent=1 // pred_check
      _
    $region95: #{fc_base_forward.1} parent=1 // pred_check_branch
      %807 = sbr.rel (0) target = $region97
    $region96: #{fc_base_forward.1} parent=1 // pred_region
      _
    $region97: #{fc_base_forward.1} parent=1 // pred_fallthru
      _
    %808 = vsyncpa [#allocation3], 1
    %809 = vsyncpa [#allocation5], 1
    %810 = vsyncpa [#allocation8], 1
    %811 = vsyncpa [#allocation11], 1

</llo_original>
